<compile_context>
chip_gen: v7x
topology: tpu7x:2x2x1
jax: 0.10.0
libtpu: 0.0.40
codegen_flags: <defaults>
</compile_context>

<pallas_src>
import functools
import math

import jax
import jax.numpy as jnp
from jax.experimental import pallas as pl
from jax.experimental.pallas import tpu as pltpu

LANES = 128      # lane width (fixed by hardware)
TM_MAX = 1024    # max sublane rows per block (1024*128*4B = 512 KiB per input)
N_SPLIT = 2      # leading parallel grid axis (both TensorCores on v7x)


def _iou_partial_kernel(x_ref, t_ref, inter_ref, total_ref, *, n_valid,
                        rows_per_split, block_rows):
    """Accumulate per-lane partial sums of (p*t) and (p+t).

    x_ref, t_ref : VMEM (block_rows, LANES) tiles, native dtype
    inter_ref    : VMEM (1, LANES) f32, resident across the reduction axis
    total_ref    : VMEM (1, LANES) f32, resident across the reduction axis
    """
    c = pl.program_id(0)   # parallel split (TensorCore on v7x)
    i = pl.program_id(1)   # sequential reduction step within the split

    @pl.when(i == 0)
    def _():
        inter_ref[...] = jnp.zeros_like(inter_ref)
        total_ref[...] = jnp.zeros_like(total_ref)

    p = jax.nn.sigmoid(x_ref[...].astype(jnp.float32))   # 1 EUP op / element
    t = t_ref[...].astype(jnp.float32)

    row0 = i * block_rows                         # first local row of tile
    flat0 = (c * rows_per_split + row0) * LANES   # first global flat index

    # Scalar condition: does this tile touch padded / out-of-range elements?
    needs_mask = jnp.logical_or(
        flat0 + block_rows * LANES > n_valid,     # global zero-padding tail
        row0 + block_rows > rows_per_split,       # partial edge block
    )

    def _accumulate(pt, ps):
        inter_ref[...] += jnp.sum(pt, axis=0, keepdims=True)   # sublane reduce
        total_ref[...] += jnp.sum(ps, axis=0, keepdims=True)

    @pl.when(jnp.logical_not(needs_mask))
    def _():
        # Hot path (>99% of tiles): no per-element mask math.
        _accumulate(p * t, p + t)

    @pl.when(needs_mask)
    def _():
        # Tail tiles only: mask out padding and edge-block garbage.
        rows = jax.lax.broadcasted_iota(jnp.int32, (block_rows, LANES), 0)
        cols = jax.lax.broadcasted_iota(jnp.int32, (block_rows, LANES), 1)
        valid = jnp.logical_and(
            row0 + rows < rows_per_split,
            flat0 + rows * LANES + cols < n_valid)
        _accumulate(jnp.where(valid, p * t, 0.0),
                    jnp.where(valid, p + t, 0.0))


@jax.jit
def iou_loss(inputs, targets, smooth=1.0):
    """inputs: logits, targets: {0,1} masks (same shape). Returns f32 scalar."""
    n_valid = math.prod(inputs.shape)

    x = inputs.reshape(-1)     # native dtype: no wrapper upcast copy
    t = targets.reshape(-1)

    # Pad (only if needed) so the flat array reshapes to
    # (N_SPLIT, rows_per_split, LANES) with rows_per_split a multiple of 8.
    chunk = N_SPLIT * 8 * LANES
    padded_n = ((n_valid + chunk - 1) // chunk) * chunk
    pad = padded_n - n_valid
    if pad:  # static; padded elements are masked out inside the kernel
        x = jnp.pad(x, (0, pad))
        t = jnp.pad(t, (0, pad))

    rows_per_split = padded_n // (N_SPLIT * LANES)
    x3 = x.reshape(N_SPLIT, rows_per_split, LANES)
    t3 = t.reshape(N_SPLIT, rows_per_split, LANES)

    block_rows = min(TM_MAX, rows_per_split)
    tiles_per_split = (rows_per_split + block_rows - 1) // block_rows

    kernel = functools.partial(
        _iou_partial_kernel,
        n_valid=n_valid,
        rows_per_split=rows_per_split,
        block_rows=block_rows,
    )

    inter_p, total_p = pl.pallas_call(
        kernel,
        out_shape=(
            jax.ShapeDtypeStruct((N_SPLIT, 1, LANES), jnp.float32),
            jax.ShapeDtypeStruct((N_SPLIT, 1, LANES), jnp.float32),
        ),
        grid_spec=pltpu.PrefetchScalarGridSpec(
            num_scalar_prefetch=0,
            grid=(N_SPLIT, tiles_per_split),
            in_specs=[
                pl.BlockSpec((None, block_rows, LANES), lambda c, i: (c, i, 0)),
                pl.BlockSpec((None, block_rows, LANES), lambda c, i: (c, i, 0)),
            ],
            out_specs=[
                pl.BlockSpec((None, 1, LANES), lambda c, i: (c, 0, 0)),
                pl.BlockSpec((None, 1, LANES), lambda c, i: (c, 0, 0)),
            ],
        ),
        compiler_params=pltpu.CompilerParams(
            dimension_semantics=("parallel", "arbitrary")),
    )(x3, t3)

    # Tiny cross-lane / cross-core combine + IoU formula (scalar work).
    intersection = jnp.sum(inter_p)
    total = jnp.sum(total_p)
    union = total - intersection
    iou = (intersection + smooth) / (union + smooth)
    return 1.0 - iou


def _iou_loss_ref(inputs, targets, smooth=1.0):
    """Pure-JAX reference mirroring the PyTorch IoULoss module."""
    p = jax.nn.sigmoid(inputs.astype(jnp.float32)).reshape(-1)
    t = targets.astype(jnp.float32).reshape(-1)
    intersection = jnp.sum(p * t)
    total = jnp.sum(p + t)
    union = total - intersection
    return 1.0 - (intersection + smooth) / (union + smooth)


if __name__ == "__main__":
    key = jax.random.PRNGKey(0)
    k1, k2 = jax.random.split(key)
    # NCHW logits and binary masks, small shapes.
    inputs = jax.random.normal(k1, (2, 4, 16, 16), dtype=jnp.float32)
    targets = (jax.random.uniform(k2, (2, 4, 16, 16)) > 0.5).astype(jnp.float32)

    loss = iou_loss(inputs, targets)
    jax.block_until_ready(loss)

    ref = _iou_loss_ref(inputs, targets)
    assert jnp.allclose(loss, ref, rtol=1e-5, atol=1e-6), (loss, ref)

    print("KERNEL_OK")
</pallas_src>

<mosaic_0001>
module attributes {stable_mosaic.version = 11 : i64} {
  func.func @_iou_partial_kernel(%arg0: i32, %arg1: i32, %arg2: memref<1x8x128xf32, #tpu.memory_space<vmem>>, %arg3: memref<1x8x128xf32, #tpu.memory_space<vmem>>, %arg4: memref<1x1x128xf32, #tpu.memory_space<vmem>>, %arg5: memref<1x1x128xf32, #tpu.memory_space<vmem>>) attributes {dimension_semantics = [#tpu.dimension_semantics<parallel>, #tpu.dimension_semantics<arbitrary>], iteration_bounds = array<i64: 2, 1>, scalar_prefetch = 0 : i64, scratch_operands = 0 : i64, tpu.core_type = #tpu.core_type<tc>, window_params = [{transform_indices = @transform_0, window_bounds = array<i64: 1, 8, 128>}, {transform_indices = @transform_1, window_bounds = array<i64: 1, 8, 128>}, {transform_indices = @transform_2, window_bounds = array<i64: 1, 1, 128>}, {transform_indices = @transform_3, window_bounds = array<i64: 1, 1, 128>}]} {
    %c0_i32 = arith.constant 0 : i32
    %0 = arith.cmpi eq, %arg1, %c0_i32 : i32
    %1 = arith.extui %0 : i1 to i32
    %c0_i32_0 = arith.constant 0 : i32
    %2 = arith.cmpi ne, %1, %c0_i32_0 : i32
    scf.if %2 {
      %cst_11 = arith.constant 0.000000e+00 : f32
      %26 = vector.broadcast %cst_11 : f32 to vector<1x128xf32>
      %c0_12 = arith.constant 0 : index
      %c0_13 = arith.constant 0 : index
      %c0_14 = arith.constant 0 : index
      %27 = vector.load %arg4[%c0_12, %c0_13, %c0_14] : memref<1x1x128xf32, #tpu.memory_space<vmem>>, vector<1x1x128xf32>
      %28 = vector.shape_cast %27 : vector<1x1x128xf32> to vector<1x128xf32>
      %29 = vector.shape_cast %26 : vector<1x128xf32> to vector<1x1x128xf32>
      tpu.vector_store %arg4[%c0_12, %c0_13, %c0_14], %29 {strides = array<i32>} : memref<1x1x128xf32, #tpu.memory_space<vmem>>, vector<1x1x128xf32>,
      %cst_15 = arith.constant 0.000000e+00 : f32
      %30 = vector.broadcast %cst_15 : f32 to vector<1x128xf32>
      %c0_16 = arith.constant 0 : index
      %c0_17 = arith.constant 0 : index
      %c0_18 = arith.constant 0 : index
      %31 = vector.load %arg5[%c0_16, %c0_17, %c0_18] : memref<1x1x128xf32, #tpu.memory_space<vmem>>, vector<1x1x128xf32>
      %32 = vector.shape_cast %31 : vector<1x1x128xf32> to vector<1x128xf32>
      %33 = vector.shape_cast %30 : vector<1x128xf32> to vector<1x1x128xf32>
      tpu.vector_store %arg5[%c0_16, %c0_17, %c0_18], %33 {strides = array<i32>} : memref<1x1x128xf32, #tpu.memory_space<vmem>>, vector<1x1x128xf32>,
    } else {
    }
    %c0 = arith.constant 0 : index
    %c0_1 = arith.constant 0 : index
    %c0_2 = arith.constant 0 : index
    %3 = vector.load %arg2[%c0, %c0_1, %c0_2] : memref<1x8x128xf32, #tpu.memory_space<vmem>>, vector<1x8x128xf32>
    %4 = vector.shape_cast %3 : vector<1x8x128xf32> to vector<8x128xf32>
    %5 = arith.negf %4 : vector<8x128xf32>
    %6 = math.exp %5 : vector<8x128xf32>
    %cst = arith.constant 1.000000e+00 : f32
    %7 = vector.broadcast %cst : f32 to vector<8x128xf32>
    %8 = arith.addf %7, %6 : vector<8x128xf32>
    %9 = arith.divf %7, %8 : vector<8x128xf32>
    %c0_3 = arith.constant 0 : index
    %c0_4 = arith.constant 0 : index
    %c0_5 = arith.constant 0 : index
    %10 = vector.load %arg3[%c0_3, %c0_4, %c0_5] : memref<1x8x128xf32, #tpu.memory_space<vmem>>, vector<1x8x128xf32>
    %11 = vector.shape_cast %10 : vector<1x8x128xf32> to vector<8x128xf32>
    %c8_i32 = arith.constant 8 : i32
    %12 = arith.muli %arg1, %c8_i32 : i32
    %c8_i32_6 = arith.constant 8 : i32
    %13 = arith.muli %arg0, %c8_i32_6 : i32
    %14 = arith.addi %13, %12 : i32
    %c128_i32 = arith.constant 128 : i32
    %15 = arith.muli %14, %c128_i32 : i32
    %c1024_i32 = arith.constant 1024 : i32
    %16 = arith.addi %15, %c1024_i32 : i32
    %c2048_i32 = arith.constant 2048 : i32
    %17 = arith.cmpi sgt, %16, %c2048_i32 : i32
    %c8_i32_7 = arith.constant 8 : i32
    %18 = arith.addi %12, %c8_i32_7 : i32
    %c8_i32_8 = arith.constant 8 : i32
    %19 = arith.cmpi sgt, %18, %c8_i32_8 : i32
    %20 = arith.ori %17, %19 : i1
    %true = arith.constant true
    %21 = arith.xori %20, %true : i1
    %22 = arith.extui %21 : i1 to i32
    %c0_i32_9 = arith.constant 0 : i32
    %23 = arith.cmpi ne, %22, %c0_i32_9 : i32
    scf.if %23 {
      %26 = arith.mulf %9, %11 : vector<8x128xf32>
      %27 = arith.addf %9, %11 : vector<8x128xf32>
      %c0_11 = arith.constant 0 : index
      %c0_12 = arith.constant 0 : index
      %c0_13 = arith.constant 0 : index
      %28 = vector.load %arg4[%c0_11, %c0_12, %c0_13] : memref<1x1x128xf32, #tpu.memory_space<vmem>>, vector<1x1x128xf32>
      %29 = vector.shape_cast %28 : vector<1x1x128xf32> to vector<1x128xf32>
      %cst_14 = arith.constant dense<0.000000e+00> : vector<128xf32>
      %30 = vector.multi_reduction <add>, %26, %cst_14 [0] : vector<8x128xf32> to vector<128xf32>
      %31 = vector.shape_cast %30 : vector<128xf32> to vector<1x128xf32>
      %32 = arith.addf %29, %31 : vector<1x128xf32>
      %c0_15 = arith.constant 0 : index
      %c0_16 = arith.constant 0 : index
      %c0_17 = arith.constant 0 : index
      %33 = vector.load %arg4[%c0_15, %c0_16, %c0_17] : memref<1x1x128xf32, #tpu.memory_space<vmem>>, vector<1x1x128xf32>
      %34 = vector.shape_cast %33 : vector<1x1x128xf32> to vector<1x128xf32>
      %35 = vector.shape_cast %32 : vector<1x128xf32> to vector<1x1x128xf32>
      tpu.vector_store %arg4[%c0_15, %c0_16, %c0_17], %35 {strides = array<i32>} : memref<1x1x128xf32, #tpu.memory_space<vmem>>, vector<1x1x128xf32>,
      %c0_18 = arith.constant 0 : index
      %c0_19 = arith.constant 0 : index
      %c0_20 = arith.constant 0 : index
      %36 = vector.load %arg5[%c0_18, %c0_19, %c0_20] : memref<1x1x128xf32, #tpu.memory_space<vmem>>, vector<1x1x128xf32>
      %37 = vector.shape_cast %36 : vector<1x1x128xf32> to vector<1x128xf32>
      %cst_21 = arith.constant dense<0.000000e+00> : vector<128xf32>
      %38 = vector.multi_reduction <add>, %27, %cst_21 [0] : vector<8x128xf32> to vector<128xf32>
      %39 = vector.shape_cast %38 : vector<128xf32> to vector<1x128xf32>
      %40 = arith.addf %37, %39 : vector<1x128xf32>
      %c0_22 = arith.constant 0 : index
      %c0_23 = arith.constant 0 : index
      %c0_24 = arith.constant 0 : index
      %41 = vector.load %arg5[%c0_22, %c0_23, %c0_24] : memref<1x1x128xf32, #tpu.memory_space<vmem>>, vector<1x1x128xf32>
      %42 = vector.shape_cast %41 : vector<1x1x128xf32> to vector<1x128xf32>
      %43 = vector.shape_cast %40 : vector<1x128xf32> to vector<1x1x128xf32>
      tpu.vector_store %arg5[%c0_22, %c0_23, %c0_24], %43 {strides = array<i32>} : memref<1x1x128xf32, #tpu.memory_space<vmem>>, vector<1x1x128xf32>,
    } else {
    }
    %24 = arith.extui %20 : i1 to i32
    %c0_i32_10 = arith.constant 0 : i32
    %25 = arith.cmpi ne, %24, %c0_i32_10 : i32
    scf.if %25 {
      %26 = tpu.iota {dimensions = array<i32: 0>} : vector<8x128xi32>
      %27 = tpu.iota {dimensions = array<i32: 1>} : vector<8x128xi32>
      %28 = vector.broadcast %12 : i32 to vector<8x128xi32>
      %29 = arith.addi %28, %26 : vector<8x128xi32>
      %c8_i32_11 = arith.constant 8 : i32
      %30 = vector.broadcast %c8_i32_11 : i32 to vector<8x128xi32>
      %31 = arith.cmpi slt, %29, %30 : vector<8x128xi32>
      %c128_i32_12 = arith.constant 128 : i32
      %32 = vector.broadcast %c128_i32_12 : i32 to vector<8x128xi32>
      %33 = arith.muli %26, %32 : vector<8x128xi32>
      %34 = vector.broadcast %15 : i32 to vector<8x128xi32>
      %35 = arith.addi %34, %33 : vector<8x128xi32>
      %36 = arith.addi %35, %27 : vector<8x128xi32>
      %c2048_i32_13 = arith.constant 2048 : i32
      %37 = vector.broadcast %c2048_i32_13 : i32 to vector<8x128xi32>
      %38 = arith.cmpi slt, %36, %37 : vector<8x128xi32>
      %39 = arith.andi %31, %38 : vector<8x128xi1>
      %40 = arith.mulf %9, %11 : vector<8x128xf32>
      %cst_14 = arith.constant 0.000000e+00 : f32
      %41 = vector.broadcast %cst_14 : f32 to vector<8x128xf32>
      %42 = arith.select %39, %40, %41 : vector<8x128xi1>, vector<8x128xf32>
      %43 = arith.addf %9, %11 : vector<8x128xf32>
      %cst_15 = arith.constant 0.000000e+00 : f32
      %44 = vector.broadcast %cst_15 : f32 to vector<8x128xf32>
      %45 = arith.select %39, %43, %44 : vector<8x128xi1>, vector<8x128xf32>
      %c0_16 = arith.constant 0 : index
      %c0_17 = arith.constant 0 : index
      %c0_18 = arith.constant 0 : index
      %46 = vector.load %arg4[%c0_16, %c0_17, %c0_18] : memref<1x1x128xf32, #tpu.memory_space<vmem>>, vector<1x1x128xf32>
      %47 = vector.shape_cast %46 : vector<1x1x128xf32> to vector<1x128xf32>
      %cst_19 = arith.constant dense<0.000000e+00> : vector<128xf32>
      %48 = vector.multi_reduction <add>, %42, %cst_19 [0] : vector<8x128xf32> to vector<128xf32>
      %49 = vector.shape_cast %48 : vector<128xf32> to vector<1x128xf32>
      %50 = arith.addf %47, %49 : vector<1x128xf32>
      %c0_20 = arith.constant 0 : index
      %c0_21 = arith.constant 0 : index
      %c0_22 = arith.constant 0 : index
      %51 = vector.load %arg4[%c0_20, %c0_21, %c0_22] : memref<1x1x128xf32, #tpu.memory_space<vmem>>, vector<1x1x128xf32>
      %52 = vector.shape_cast %51 : vector<1x1x128xf32> to vector<1x128xf32>
      %53 = vector.shape_cast %50 : vector<1x128xf32> to vector<1x1x128xf32>
      tpu.vector_store %arg4[%c0_20, %c0_21, %c0_22], %53 {strides = array<i32>} : memref<1x1x128xf32, #tpu.memory_space<vmem>>, vector<1x1x128xf32>,
      %c0_23 = arith.constant 0 : index
      %c0_24 = arith.constant 0 : index
      %c0_25 = arith.constant 0 : index
      %54 = vector.load %arg5[%c0_23, %c0_24, %c0_25] : memref<1x1x128xf32, #tpu.memory_space<vmem>>, vector<1x1x128xf32>
      %55 = vector.shape_cast %54 : vector<1x1x128xf32> to vector<1x128xf32>
      %cst_26 = arith.constant dense<0.000000e+00> : vector<128xf32>
      %56 = vector.multi_reduction <add>, %45, %cst_26 [0] : vector<8x128xf32> to vector<128xf32>
      %57 = vector.shape_cast %56 : vector<128xf32> to vector<1x128xf32>
      %58 = arith.addf %55, %57 : vector<1x128xf32>
      %c0_27 = arith.constant 0 : index
      %c0_28 = arith.constant 0 : index
      %c0_29 = arith.constant 0 : index
      %59 = vector.load %arg5[%c0_27, %c0_28, %c0_29] : memref<1x1x128xf32, #tpu.memory_space<vmem>>, vector<1x1x128xf32>
      %60 = vector.shape_cast %59 : vector<1x1x128xf32> to vector<1x128xf32>
      %61 = vector.shape_cast %58 : vector<1x128xf32> to vector<1x1x128xf32>
      tpu.vector_store %arg5[%c0_27, %c0_28, %c0_29], %61 {strides = array<i32>} : memref<1x1x128xf32, #tpu.memory_space<vmem>>, vector<1x1x128xf32>,
    } else {
    }
    return
  }
  func.func @transform_0(%arg0: i32, %arg1: i32) -> (i32, i32, i32) {
    %c0_i32 = arith.constant 0 : i32
    %c0_i32_0 = arith.constant 0 : i32
    return %arg0, %arg1, %c0_i32 : i32, i32, i32
  }
  func.func @transform_1(%arg0: i32, %arg1: i32) -> (i32, i32, i32) {
    %c0_i32 = arith.constant 0 : i32
    %c0_i32_0 = arith.constant 0 : i32
    return %arg0, %arg1, %c0_i32 : i32, i32, i32
  }
  func.func @transform_2(%arg0: i32, %arg1: i32) -> (i32, i32, i32) {
    %c0_i32 = arith.constant 0 : i32
    %c0_i32_0 = arith.constant 0 : i32
    %c0_i32_1 = arith.constant 0 : i32
    return %arg0, %c0_i32, %c0_i32_0 : i32, i32, i32
  }
  func.func @transform_3(%arg0: i32, %arg1: i32) -> (i32, i32, i32) {
    %c0_i32 = arith.constant 0 : i32
    %c0_i32_0 = arith.constant 0 : i32
    %c0_i32_1 = arith.constant 0 : i32
    return %arg0, %c0_i32, %c0_i32_0 : i32, i32, i32
  }
}

</mosaic_0001>

<llo_original>
// kernel: iou_loss.1
$region0: #{iou_loss.1}
  #allocation0 [shape = 'u32[]', space=smem, size = 0x4, offset = 0x4, fixed_abs, tag = 'smem constant byte address 0x4 - core index']
  #allocation1 [shape = 'u32[144,128]{1,0:T(1,128)}', space=vmem, size = 0x12000, scoped, tag = 'internal scratch']
  %s0 = inlined_call_operand.vmem [shape: f32[2,8,128], index: 0, kind: input, shape index: {}]
  %s1 = inlined_call_operand.vmem [shape: f32[2,8,128], index: 1, kind: input, shape index: {}]
  %s2 = inlined_call_operand.vmem [shape: f32[2,1,128], index: 2, kind: output, shape index: {0}]
  %s3 = inlined_call_operand.vmem [shape: f32[2,1,128], index: 3, kind: output, shape index: {1}]
  %4 = xla_tuple %s2, %s3
  %s5 = sld [smem:[#allocation0]]
  $region61: #{iou_loss.1} parent=0
    _
  %s7 = ssub.s32 1, %s5
  %s8 = scalar_select 0, %s7, %s5
  loop: start=0, step=1, limit=4
  $region2: #{iou_loss.1} parent=0 // loop_pre_header
    _
  $region3: #{iou_loss.1} parent=0 // loop_header
    %s10 = sphi 0, %s14
    %p11 = scmp.ge.s32.totalorder %s10, 4
    %s17 = sphi 0, %s29
    %s18 = sphi 0, %s25
    %s19 = sphi 0, %s17
    %s20 = sphi 0, %s18
    %s21 = sphi 0, %s19
    %s22 = sphi 0, %s20
    %s34 = sphi 0, %s36
    %s37 = sphi 0, %s34
    %s38 = sphi 0, %s37
    %s54 = sphi 0, %s38
    %s62 = sphi 0, %s64
    %s65 = sphi 0, %s62
    %s66 = sphi 0, %s65
    %s82 = sphi 0, %s66
    %s88 = sphi 0, %s90
    %s91 = sphi 0, %s88
    %s92 = sphi 0, %s91
    %s108 = sphi 0, %s92
    %s114 = sphi 0, %s116
    %s117 = sphi 0, %s114
    %s118 = sphi 0, %s117
    %s134 = sphi 0, %s118
  $region4: #{iou_loss.1} parent=0 // loop_header_branch
    %13 = sbr.rel (%p11) target = $region8
  $region5: #{iou_loss.1} parent=0 // loop_body
    %s15 = ssub.s32 %s10, 1
    %s16 = ssub.s32 %s10, 2
    %s23 = sadd.s32 1, %s18
    %p24 = scmp.ge.s32.totalorder %s23, 1
    %s25 = scalar_select %p24, 0, %s23
    %s26 = sadd.s32 1, %s17
    %s27 = scalar_select %p24, %s26, %s17
    %p28 = scmp.ge.s32.totalorder %s27, 2
    %s29 = scalar_select %p28, 0, %s27
    %s30 = ssub.s32 %s17, %s29
    %s31 = ssub.s32 %s18, %s25
    %s32 = sor.u32 %s30, %s31
    %p33 = scmp.eq.s32.totalorder %s32, 0
    %s35 = sadd.s32 %s34, 1
    %s36 = scalar_select %p33, %s34, %s35
    %p39 = pneg %p33
    %p40 = scmp.eq.s32.totalorder %s10, 1
    %p41 = por %p39, %p40
    %p42 = scmp.ne.s32.totalorder %s34, %s37
    %p43 = scmp.eq.s32.totalorder %s10, 0
    %p44 = por %p42, %p43
    %p45 = scmp.ne.s32.totalorder %s34, %s37
    %p46 = scmp.eq.s32.totalorder %s15, 1
    %p47 = por %p45, %p46
    %p48 = scmp.ne.s32.totalorder %s37, %s38
    %p49 = scmp.eq.s32.totalorder %s15, 0
    %p50 = por %p48, %p49
    %p51 = scmp.ne.s32.totalorder %s37, %s38
    %p52 = scmp.eq.s32.totalorder %s16, 1
    %p53 = por %p51, %p52
    %p55 = scmp.ne.s32.totalorder %s38, %s54
    %p56 = scmp.eq.s32.totalorder %s16, 0
    %p57 = por %p55, %p56
    %s58 = ssub.s32 %s17, %s29
    %s59 = ssub.s32 %s18, %s25
    %s60 = sor.u32 %s58, %s59
    %p61 = scmp.eq.s32.totalorder %s60, 0
    %s63 = sadd.s32 %s62, 1
    %s64 = scalar_select %p61, %s62, %s63
    %p67 = pneg %p61
    %p68 = scmp.eq.s32.totalorder %s10, 1
    %p69 = por %p67, %p68
    %p70 = scmp.ne.s32.totalorder %s62, %s65
    %p71 = scmp.eq.s32.totalorder %s10, 0
    %p72 = por %p70, %p71
    %p73 = scmp.ne.s32.totalorder %s62, %s65
    %p74 = scmp.eq.s32.totalorder %s15, 1
    %p75 = por %p73, %p74
    %p76 = scmp.ne.s32.totalorder %s65, %s66
    %p77 = scmp.eq.s32.totalorder %s15, 0
    %p78 = por %p76, %p77
    %p79 = scmp.ne.s32.totalorder %s65, %s66
    %p80 = scmp.eq.s32.totalorder %s16, 1
    %p81 = por %p79, %p80
    %p83 = scmp.ne.s32.totalorder %s66, %s82
    %p84 = scmp.eq.s32.totalorder %s16, 0
    %p85 = por %p83, %p84
    %s86 = ssub.s32 %s17, %s29
    %p87 = scmp.eq.s32.totalorder %s86, 0
    %s89 = sadd.s32 %s88, 1
    %s90 = scalar_select %p87, %s88, %s89
    %p93 = pneg %p87
    %p94 = scmp.eq.s32.totalorder %s10, 1
    %p95 = por %p93, %p94
    %p96 = scmp.ne.s32.totalorder %s88, %s91
    %p97 = scmp.eq.s32.totalorder %s10, 0
    %p98 = por %p96, %p97
    %p99 = scmp.ne.s32.totalorder %s88, %s91
    %p100 = scmp.eq.s32.totalorder %s15, 1
    %p101 = por %p99, %p100
    %p102 = scmp.ne.s32.totalorder %s91, %s92
    %p103 = scmp.eq.s32.totalorder %s15, 0
    %p104 = por %p102, %p103
    %p105 = scmp.ne.s32.totalorder %s91, %s92
    %p106 = scmp.eq.s32.totalorder %s16, 1
    %p107 = por %p105, %p106
    %p109 = scmp.ne.s32.totalorder %s92, %s108
    %p110 = scmp.eq.s32.totalorder %s16, 0
    %p111 = por %p109, %p110
    %s112 = ssub.s32 %s17, %s29
    %p113 = scmp.eq.s32.totalorder %s112, 0
    %s115 = sadd.s32 %s114, 1
    %s116 = scalar_select %p113, %s114, %s115
    %p119 = pneg %p113
    %p120 = scmp.eq.s32.totalorder %s10, 1
    %p121 = por %p119, %p120
    %p122 = scmp.ne.s32.totalorder %s114, %s117
    %p123 = scmp.eq.s32.totalorder %s10, 0
    %p124 = por %p122, %p123
    %p125 = scmp.ne.s32.totalorder %s114, %s117
    %p126 = scmp.eq.s32.totalorder %s15, 1
    %p127 = por %p125, %p126
    %p128 = scmp.ne.s32.totalorder %s117, %s118
    %p129 = scmp.eq.s32.totalorder %s15, 0
    %p130 = por %p128, %p129
    %p131 = scmp.ne.s32.totalorder %s117, %s118
    %p132 = scmp.eq.s32.totalorder %s16, 1
    %p133 = por %p131, %p132
    %p135 = scmp.ne.s32.totalorder %s118, %s134
    %p136 = scmp.eq.s32.totalorder %s16, 0
    %p137 = por %p135, %p136
    %p138 = scmp.le.s32.totalorder 1, %s10
    %p139 = scmp.lt.s32.totalorder %s10, 3
    %p140 = pnand %p138, %p139
    %p141 = pneg %p140
    // Predicated region
    $region9: #{iou_loss.1} parent=5 // pred_check
      _
    $region10: #{iou_loss.1} parent=5 // pred_check_branch
      %143 = sbr.rel (%p140) target = $region12
    $region11: #{iou_loss.1} parent=5 // pred_region
      %s144 = ssub.s32 %s10, 1
    $region12: #{iou_loss.1} parent=5 // pred_fallthru
      _
    %p145 = scmp.lt.s32.totalorder %s10, 2
    // Predicated region
    $region13: #{iou_loss.1} parent=5 // pred_check
      %p146 = pneg %p145
    $region14: #{iou_loss.1} parent=5 // pred_check_branch
      %148 = sbr.rel (%p146) target = $region16
    $region15: #{iou_loss.1} parent=5 // pred_region
      // Predicated region
      $region17: #{iou_loss.1} parent=15 // pred_check
        %p149 = pneg %p44
      $region18: #{iou_loss.1} parent=15 // pred_check_branch
        %151 = sbr.rel (%p149) target = $region20
      $region19: #{iou_loss.1} parent=15 // pred_region
        %p152 = scmp.lt.s32.totalorder %s17, 1
        %s153 = scalar_select %p152, %s17, 1
        %p154 = scmp.lt.s32.totalorder %s18, 0
        %s155 = scalar_select %p154, %s18, 0
        %s156 = sadd.s32 %s155, %s153
        %s157 = smul.addr %s156, 8
        %s158 = scalar_lea.vmem %s0, %s157
      $region20: #{iou_loss.1} parent=15 // pred_fallthru
        _
      // Predicated region
      $region21: #{iou_loss.1} parent=15 // pred_check
        %p159 = pneg %p72
      $region22: #{iou_loss.1} parent=15 // pred_check_branch
        %161 = sbr.rel (%p159) target = $region24
      $region23: #{iou_loss.1} parent=15 // pred_region
        %p162 = scmp.lt.s32.totalorder %s17, 1
        %s163 = scalar_select %p162, %s17, 1
        %p164 = scmp.lt.s32.totalorder %s18, 0
        %s165 = scalar_select %p164, %s18, 0
        %s166 = sadd.s32 %s165, %s163
        %s167 = smul.addr %s166, 8
        %s168 = scalar_lea.vmem %s1, %s167
      $region24: #{iou_loss.1} parent=15 // pred_fallthru
        _
    $region16: #{iou_loss.1} parent=5 // pred_fallthru
      _
    %p169 = scmp.le.s32.totalorder 1, %s10
    %p170 = scmp.lt.s32.totalorder %s10, 3
    %p171 = pnand %p169, %p170
    %p172 = pneg %p171
    // Predicated region
    $region25: #{iou_loss.1} parent=5 // pred_check
      _
    $region26: #{iou_loss.1} parent=5 // pred_check_branch
      %174 = sbr.rel (%p171) target = $region28
    $region27: #{iou_loss.1} parent=5 // pred_region
      %s175 = ssub.s32 %s10, 1
      %p176 = scmp.lt.s32.totalorder %s19, 1
      %s177 = scalar_select %p176, %s19, 1
      %p178 = scmp.lt.s32.totalorder %s20, 0
      %s179 = scalar_select %p178, %s20, 0
      %s180 = sadd.s32 %s179, %s177
      %s181 = smul.addr %s180, 8
      %s182 = scalar_lea.vmem %s0, %s181
      %p183 = pneg %p50
      %p184 = pneg %p47
      %p185 = scmp.lt.s32.totalorder %s19, 1
      %s186 = scalar_select %p185, %s19, 1
      %p187 = scmp.lt.s32.totalorder %s20, 0
      %s188 = scalar_select %p187, %s20, 0
      %s189 = sadd.s32 %s188, %s186
      %s190 = smul.addr %s189, 8
      %s191 = scalar_lea.vmem %s1, %s190
      %p192 = pneg %p78
      %p193 = pneg %p75
      %p194 = pneg %p104
      %p195 = pneg %p101
      %p196 = scmp.lt.s32.totalorder %s19, 1
      %s197 = scalar_select %p196, %s19, 1
      %s198 = scalar_lea.vmem %s2, %s197
      %p199 = pneg %p130
      %p200 = pneg %p127
      %p201 = scmp.lt.s32.totalorder %s19, 1
      %s202 = scalar_select %p201, %s19, 1
      %s203 = scalar_lea.vmem %s3, %s202
      %p204 = scmp.lt.s32.totalorder %s19, 1
      %s205 = scalar_select %p204, %s19, 1
      %p206 = scmp.lt.s32.totalorder %s20, 0
      %s207 = scalar_select %p206, %s20, 0
      %s208 = sadd.s32 %s207, %s205
      %s209 = smul.addr %s208, 8
      %s210 = scalar_lea.vmem %s0, %s209
      %p211 = scmp.lt.s32.totalorder %s19, 1
      %s212 = scalar_select %p211, %s19, 1
      %p213 = scmp.lt.s32.totalorder %s20, 0
      %s214 = scalar_select %p213, %s20, 0
      %s215 = sadd.s32 %s214, %s212
      %s216 = smul.addr %s215, 8
      %s217 = scalar_lea.vmem %s1, %s216
      %p218 = scmp.lt.s32.totalorder %s19, 1
      %s219 = scalar_select %p218, %s19, 1
      %s220 = scalar_lea.vmem %s2, %s219
      %p221 = scmp.lt.s32.totalorder %s19, 1
      %s222 = scalar_select %p221, %s19, 1
      %s223 = scalar_lea.vmem %s3, %s222
      %p224 = scmp.eq.s32.totalorder %s20, 0
      // Predicated region
      $region29: #{iou_loss.1} parent=27 // pred_check
        %p225 = pneg %p224
      $region30: #{iou_loss.1} parent=27 // pred_check_branch
        %227 = sbr.rel (%p225) target = $region32
      $region31: #{iou_loss.1} parent=27 // pred_region
        %228 = vst [vmem:[%s220] sm:$0x1] 0.0
        %229 = vst [vmem:[%s223] sm:$0x1] 0.0
      $region32: #{iou_loss.1} parent=27 // pred_fallthru
        _
      %v230 = vld [vmem:[%s210] sm:$0xff]
      %v231 = vxor.u32 %v230, 2147483648
      %v232 = vmul.f32 %v231, 1.442695
      %v233 = vpow.pop %v232
      %v234 = vadd.f32 %v233, 1.0
      %v235 = vrcp.pop %v234
      %v236 = vmul.f32 1.0, %v235
      %v237 = vld [vmem:[%s217] sm:$0xff]
      %s238 = smul.u32 %s20, 8
      %s239 = smul.u32 %s19, 8
      %s240 = sadd.s32 %s239, %s238
      %s241 = smul.u32 %s240, 128
      %s242 = sadd.s32 %s241, 1024
      %p243 = scmp.gt.s32.totalorder %s242, 2048
      %s244 = sadd.s32 %s238, 8
      %p245 = scmp.gt.s32.totalorder %s244, 8
      %p246 = por %p243, %p245
      // Predicated region
      $region33: #{iou_loss.1} parent=27 // pred_check
        %p247 = pneg %p246
      $region34: #{iou_loss.1} parent=27 // pred_check_branch
        %249 = sbr.rel (%p247) target = $region36
      $region35: #{iou_loss.1} parent=27 // pred_region
        %v250 = vlaneseq
        %v251 = vshrl.u32 %v250, 7
        %v252 = vlaneseq
        %v253 = vand.u32 %v252, 127
        %v254 = vstv %s238
        %v255 = vadd.s32 %v254, %v251
        %vm256 = vcmp.lt.s32.totalorder %v255, 8
        %v257 = vmul.u32 %v251, 128
        %v258 = vstv %s241
        %v259 = vadd.s32 %v258, %v257
        %v260 = vadd.s32 %v259, %v253
        %vm261 = vcmp.lt.s32.totalorder %v260, 2048
        %vm262 = vmand %vm256, %vm261
        %v263 = vmul.f32 %v236, %v237
        %v264 = vsel %vm262, %v263, 0.0
        %v265 = vadd.f32 %v236, %v237
        %v266 = vsel %vm262, %v265, 0.0
        %v267 = vld [vmem:[%s220] sm:$0x1]
        %v268 = vrot.slane %v264, 4
        %v269 = vadd.f32 %v264, %v268
        %v270 = vrot.slane %v269, 2
        %v271 = vadd.f32 %v269, %v270
        %v272 = vrot.slane %v271, 1
        %v273 = vadd.f32 %v271, %v272
        %v274 = vadd.f32 %v267, %v273
        %275 = vst [vmem:[%s220] sm:$0x1] %v274
        %v276 = vld [vmem:[%s223] sm:$0x1]
        %v277 = vrot.slane %v266, 4
        %v278 = vadd.f32 %v266, %v277
        %v279 = vrot.slane %v278, 2
        %v280 = vadd.f32 %v278, %v279
        %v281 = vrot.slane %v280, 1
        %v282 = vadd.f32 %v280, %v281
        %v283 = vadd.f32 %v276, %v282
        %284 = vst [vmem:[%s223] sm:$0x1] %v283
      $region36: #{iou_loss.1} parent=27 // pred_fallthru
        _
      %p285 = pneg %p246
      // Predicated region
      $region37: #{iou_loss.1} parent=27 // pred_check
        _
      $region38: #{iou_loss.1} parent=27 // pred_check_branch
        %287 = sbr.rel (%p246) target = $region40
      $region39: #{iou_loss.1} parent=27 // pred_region
        %v288 = vmul.f32 %v236, %v237
        %v289 = vadd.f32 %v236, %v237
        %v290 = vld [vmem:[%s220] sm:$0x1]
        %v291 = vrot.slane %v288, 4
        %v292 = vadd.f32 %v288, %v291
        %v293 = vrot.slane %v292, 2
        %v294 = vadd.f32 %v292, %v293
        %v295 = vrot.slane %v294, 1
        %v296 = vadd.f32 %v294, %v295
        %v297 = vadd.f32 %v290, %v296
        %298 = vst [vmem:[%s220] sm:$0x1] %v297
        %v299 = vld [vmem:[%s223] sm:$0x1]
        %v300 = vrot.slane %v289, 4
        %v301 = vadd.f32 %v289, %v300
        %v302 = vrot.slane %v301, 2
        %v303 = vadd.f32 %v301, %v302
        %v304 = vrot.slane %v303, 1
        %v305 = vadd.f32 %v303, %v304
        %v306 = vadd.f32 %v299, %v305
        %307 = vst [vmem:[%s223] sm:$0x1] %v306
      $region40: #{iou_loss.1} parent=27 // pred_fallthru
        _
      %p308 = scmp.lt.s32.totalorder %s19, 1
      %s309 = scalar_select %p308, %s19, 1
      %s310 = scalar_lea.vmem %s2, %s309
      %p311 = scmp.lt.s32.totalorder %s19, 1
      %s312 = scalar_select %p311, %s19, 1
      %s313 = scalar_lea.vmem %s3, %s312
      // Predicated region
      $region41: #{iou_loss.1} parent=27 // pred_check
        %p314 = pneg %p101
      $region42: #{iou_loss.1} parent=27 // pred_check_branch
        %316 = sbr.rel (%p314) target = $region44
      $region43: #{iou_loss.1} parent=27 // pred_region
        _
      $region44: #{iou_loss.1} parent=27 // pred_fallthru
        _
      // Predicated region
      $region45: #{iou_loss.1} parent=27 // pred_check
        %p317 = pneg %p127
      $region46: #{iou_loss.1} parent=27 // pred_check_branch
        %319 = sbr.rel (%p317) target = $region48
      $region47: #{iou_loss.1} parent=27 // pred_region
        _
      $region48: #{iou_loss.1} parent=27 // pred_fallthru
        _
    $region28: #{iou_loss.1} parent=5 // pred_fallthru
      _
    %p320 = scmp.le.s32.totalorder 2, %s10
    // Predicated region
    $region49: #{iou_loss.1} parent=5 // pred_check
      %p321 = pneg %p320
    $region50: #{iou_loss.1} parent=5 // pred_check_branch
      %323 = sbr.rel (%p321) target = $region52
    $region51: #{iou_loss.1} parent=5 // pred_region
      %s324 = ssub.s32 %s10, 2
      // Predicated region
      $region53: #{iou_loss.1} parent=51 // pred_check
        %p325 = pneg %p107
      $region54: #{iou_loss.1} parent=51 // pred_check_branch
        %327 = sbr.rel (%p325) target = $region56
      $region55: #{iou_loss.1} parent=51 // pred_region
        %p328 = scmp.lt.s32.totalorder %s21, 1
        %s329 = scalar_select %p328, %s21, 1
        %s330 = scalar_lea.vmem %s2, %s329
      $region56: #{iou_loss.1} parent=51 // pred_fallthru
        _
      // Predicated region
      $region57: #{iou_loss.1} parent=51 // pred_check
        %p331 = pneg %p133
      $region58: #{iou_loss.1} parent=51 // pred_check_branch
        %333 = sbr.rel (%p331) target = $region60
      $region59: #{iou_loss.1} parent=51 // pred_region
        %p334 = scmp.lt.s32.totalorder %s21, 1
        %s335 = scalar_select %p334, %s21, 1
        %s336 = scalar_lea.vmem %s3, %s335
      $region60: #{iou_loss.1} parent=51 // pred_fallthru
        _
    $region52: #{iou_loss.1} parent=5 // pred_fallthru
      _
  $region6: #{iou_loss.1} parent=0 // loop_footer
    %s14 = sadd.s32 1, %s10
  $region7: #{iou_loss.1} parent=0 // loop_footer_branch
    %9 = sbr.rel target = $region3
  $region8: #{iou_loss.1} parent=0 // loop_exit
    _

</llo_original>
